<compile_context>
chip_gen: v7x
topology: tpu7x:2x2x1
jax: 0.10.0
libtpu: 0.0.40
codegen_flags: <defaults>
</compile_context>

<pallas_src>
import functools

import jax
import jax.numpy as jnp
from jax import lax
from jax.experimental import pallas as pl
from jax.experimental.pallas import tpu as pltpu


def _round_up(x, m):
    return ((x + m - 1) // m) * m


def _kl_loss_kernel(s_ref, t_ref, o_ref, *, inv_t, n_rows, tile_rows, mask_rows):
    """One batch tile -> un-normalized, un-scaled partial KL sum."""
    inv_T = jnp.float32(inv_t)

    s = s_ref[...].astype(jnp.float32) * inv_T      # (tb, C) student logits / T
    t = t_ref[...].astype(jnp.float32) * inv_T      # (tb, C) teacher logits / T

    # Student: numerically-stable log_softmax along the class (lane) axis.
    s_shift = s - jnp.max(s, axis=-1, keepdims=True)
    log_p = s_shift - jnp.log(jnp.sum(jnp.exp(s_shift), axis=-1, keepdims=True))

    # Teacher: softmax + 1e-7; one reciprocal per row, then broadcast-multiply.
    t_exp = jnp.exp(t - jnp.max(t, axis=-1, keepdims=True))
    denom = jnp.sum(t_exp, axis=-1, keepdims=True)
    q = t_exp * pl.reciprocal(denom, approx=False) + jnp.float32(1e-7)

    # Exact PyTorch semantics (the +1e-7 stays inside the log as well).
    kl = q * (jnp.log(q) - log_p)

    # Reduce the class axis first; then (cheaply, on a (tb,1) vector) zero out
    # stale rows of the last partial batch tile.  Skipped at trace time when
    # B % tb == 0, so aligned batches pay nothing.
    row_sum = jnp.sum(kl, axis=-1, keepdims=True)           # (tb, 1)
    if mask_rows:
        row_ids = lax.broadcasted_iota(jnp.int32, row_sum.shape, 0)
        row_ids = row_ids + pl.program_id(0) * tile_rows
        row_sum = jnp.where(row_ids < n_rows, row_sum, jnp.float32(0.0))

    # Lane-dense partial-sum writeback (unmasked 8x128 store per tile).
    o_ref[...] = jnp.full(o_ref.shape, jnp.sum(row_sum), dtype=jnp.float32)


def kl_loss(output_batch, teacher_outputs, temperature=1.0, *, max_rows_per_tile=None):
    """[B, C] student/teacher logits (f32 or bf16) -> scalar f32 KD loss.

    `temperature` must be a Python scalar (it is baked into the kernel).
    `max_rows_per_tile` is an optional testing knob to force multiple tiles.
    """
    assert output_batch.shape == teacher_outputs.shape
    assert output_batch.ndim == 2
    B, C = output_batch.shape
    itemsize = jnp.dtype(output_batch.dtype).itemsize

    # --- dtype-aware batch-tile sizing (no host-side padding of the inputs) ---
    # VMEM per tile-row: 2 inputs x 2 pipeline buffers at the input dtype, plus
    # ~8 f32 intermediates (s, t, s_shift, exp, log_p, t_exp, q, kl) at the
    # lane-rounded class width.  24 MiB budget leaves headroom even on v7x
    # (64 MiB physical / 32 MiB scoped).
    c_lanes = _round_up(C, 128)
    bytes_per_row = 2 * 2 * c_lanes * itemsize + 8 * c_lanes * 4
    vmem_budget = 24 << 20
    tb = max(16, min(2048, (vmem_budget // bytes_per_row) // 16 * 16))
    if max_rows_per_tile is not None:
        tb = min(tb, max(16, (max_rows_per_tile // 16) * 16))
    if tb >= B:
        tb = B                       # single tile; block == full array, no row mask
    num_tiles = pl.cdiv(B, tb)
    mask_rows = (B % tb) != 0
    # TODO(synk): for vocab-scale C where even a 16-row tile overflows VMEM, add a
    # second "arbitrary" grid axis over C with an online running max/LSE carry.

    kernel = functools.partial(
        _kl_loss_kernel,
        inv_t=1.0 / float(temperature),
        n_rows=B,
        tile_rows=tb,
        mask_rows=mask_rows,
    )

    partials = pl.pallas_call(
        kernel,
        out_shape=jax.ShapeDtypeStruct((num_tiles, 8, 128), jnp.float32),
        grid_spec=pltpu.PrefetchScalarGridSpec(
            num_scalar_prefetch=0,
            grid=(num_tiles,),
            in_specs=[
                # Last block dim == full class dim C (legal even when C % 128 != 0):
                # the un-padded inputs are streamed straight from HBM.
                pl.BlockSpec((tb, C), lambda i: (i, 0)),
                pl.BlockSpec((tb, C), lambda i: (i, 0)),
            ],
            out_specs=pl.BlockSpec((1, 8, 128), lambda i: (i, 0, 0)),
        ),
        compiler_params=pltpu.CompilerParams(
            # TODO(synk): switch to pltpu.CORE_PARALLEL on v7x (2 TCs/chip) once
            # generation detection is plumbed; "parallel" is the safe default.
            dimension_semantics=("parallel",),
            vmem_limit_bytes=32 * 1024 * 1024,
        ),
        cost_estimate=pl.CostEstimate(
            flops=10 * B * C,
            transcendentals=3 * B * C + 2 * B,
            bytes_accessed=2 * B * C * itemsize + num_tiles * 8 * 128 * 4,
        ),
    )(output_batch, teacher_outputs)

    total = jnp.sum(partials[:, 0, 0])
    T = float(temperature)
    return jnp.float32(T * T) * total / jnp.float32(B)


def _kl_loss_ref(output_batch, teacher_outputs, temperature=1.0):
    # Pure-JAX reference (mirrors the PyTorch module).
    T = temperature
    log_p = jax.nn.log_softmax(output_batch.astype(jnp.float32) / T, axis=1)
    q = jax.nn.softmax(teacher_outputs.astype(jnp.float32) / T, axis=1) + 1e-7
    B = output_batch.shape[0]
    return T * T * jnp.sum(q * (jnp.log(q) - log_p)) / B


if __name__ == "__main__":
    key = jax.random.PRNGKey(0)
    k1, k2, k3, k4, k5, k6 = jax.random.split(key, 6)

    # Config 1: un-aligned shapes (C % 128 != 0), single tile, no padding anywhere.
    B1, C1 = 20, 37
    s1 = jax.random.normal(k1, (B1, C1), dtype=jnp.float32) * 2.0
    t1 = jax.random.normal(k2, (B1, C1), dtype=jnp.float32) * 2.0
    loss1 = kl_loss(s1, t1, temperature=3.0)
    jax.block_until_ready(loss1)
    ref1 = _kl_loss_ref(s1, t1, temperature=3.0)
    assert jnp.allclose(loss1, ref1, rtol=2e-5, atol=1e-6), (loss1, ref1)

    # Config 2: lane/sublane-aligned shapes with bf16 inputs (halved HBM traffic).
    B2, C2 = 16, 128
    s2 = (jax.random.normal(k3, (B2, C2), dtype=jnp.float32) * 2.0).astype(jnp.bfloat16)
    t2 = (jax.random.normal(k4, (B2, C2), dtype=jnp.float32) * 2.0).astype(jnp.bfloat16)
    loss2 = kl_loss(s2, t2, temperature=1.0)
    jax.block_until_ready(loss2)
    ref2 = _kl_loss_ref(s2, t2, temperature=1.0)
    assert jnp.allclose(loss2, ref2, rtol=2e-5, atol=1e-6), (loss2, ref2)

    # Config 3: multi-tile grid with a partial last tile (row-mask path).
    B3, C3 = 40, 96
    s3 = jax.random.normal(k5, (B3, C3), dtype=jnp.float32)
    t3 = jax.random.normal(k6, (B3, C3), dtype=jnp.float32)
    loss3 = kl_loss(s3, t3, temperature=2.0, max_rows_per_tile=16)
    jax.block_until_ready(loss3)
    ref3 = _kl_loss_ref(s3, t3, temperature=2.0)
    assert jnp.allclose(loss3, ref3, rtol=2e-5, atol=1e-6), (loss3, ref3)

    print("KERNEL_OK")
</pallas_src>

<mosaic_0001>
module attributes {stable_mosaic.version = 11 : i64} {
  func.func @_kl_loss_kernel(%arg0: i32, %arg1: memref<20x37xf32, #tpu.memory_space<vmem>>, %arg2: memref<20x37xf32, #tpu.memory_space<vmem>>, %arg3: memref<1x8x128xf32, #tpu.memory_space<vmem>>) attributes {dimension_semantics = [#tpu.dimension_semantics<parallel>], iteration_bounds = array<i64: 1>, scalar_prefetch = 0 : i64, scratch_operands = 0 : i64, tpu.core_type = #tpu.core_type<tc>, window_params = [{transform_indices = @transform_0, window_bounds = array<i64: 20, 37>}, {transform_indices = @transform_1, window_bounds = array<i64: 20, 37>}, {transform_indices = @transform_2, window_bounds = array<i64: 1, 8, 128>}]} {
    %c0 = arith.constant 0 : index
    %c0_0 = arith.constant 0 : index
    %0 = vector.load %arg1[%c0, %c0_0] : memref<20x37xf32, #tpu.memory_space<vmem>>, vector<20x37xf32>
    %cst = arith.constant 0.333333343 : f32
    %1 = vector.broadcast %cst : f32 to vector<20x37xf32>
    %2 = arith.mulf %0, %1 : vector<20x37xf32>
    %c0_1 = arith.constant 0 : index
    %c0_2 = arith.constant 0 : index
    %3 = vector.load %arg2[%c0_1, %c0_2] : memref<20x37xf32, #tpu.memory_space<vmem>>, vector<20x37xf32>
    %cst_3 = arith.constant 0.333333343 : f32
    %4 = vector.broadcast %cst_3 : f32 to vector<20x37xf32>
    %5 = arith.mulf %3, %4 : vector<20x37xf32>
    %cst_4 = arith.constant dense<0xFF800000> : vector<20xf32>
    %6 = vector.multi_reduction <maximumf>, %2, %cst_4 [1] : vector<20x37xf32> to vector<20xf32>
    %7 = vector.shape_cast %6 : vector<20xf32> to vector<20x1xf32>
    %8 = vector.broadcast %7 : vector<20x1xf32> to vector<20x37xf32>
    %9 = arith.subf %2, %8 : vector<20x37xf32>
    %10 = math.exp %9 : vector<20x37xf32>
    %cst_5 = arith.constant dense<0.000000e+00> : vector<20xf32>
    %11 = vector.multi_reduction <add>, %10, %cst_5 [1] : vector<20x37xf32> to vector<20xf32>
    %12 = vector.shape_cast %11 : vector<20xf32> to vector<20x1xf32>
    %13 = math.log %12 : vector<20x1xf32>
    %14 = vector.broadcast %13 : vector<20x1xf32> to vector<20x37xf32>
    %15 = arith.subf %9, %14 : vector<20x37xf32>
    %cst_6 = arith.constant dense<0xFF800000> : vector<20xf32>
    %16 = vector.multi_reduction <maximumf>, %5, %cst_6 [1] : vector<20x37xf32> to vector<20xf32>
    %17 = vector.shape_cast %16 : vector<20xf32> to vector<20x1xf32>
    %18 = vector.broadcast %17 : vector<20x1xf32> to vector<20x37xf32>
    %19 = arith.subf %5, %18 : vector<20x37xf32>
    %20 = math.exp %19 : vector<20x37xf32>
    %cst_7 = arith.constant dense<0.000000e+00> : vector<20xf32>
    %21 = vector.multi_reduction <add>, %20, %cst_7 [1] : vector<20x37xf32> to vector<20xf32>
    %22 = vector.shape_cast %21 : vector<20xf32> to vector<20x1xf32>
    %23 = tpu.reciprocal %22 : vector<20x1xf32> -> vector<20x1xf32>
    %24 = vector.broadcast %23 : vector<20x1xf32> to vector<20x37xf32>
    %25 = arith.mulf %20, %24 : vector<20x37xf32>
    %cst_8 = arith.constant 1.000000e-07 : f32
    %26 = vector.broadcast %cst_8 : f32 to vector<20x37xf32>
    %27 = arith.addf %25, %26 : vector<20x37xf32>
    %28 = math.log %27 : vector<20x37xf32>
    %29 = arith.subf %28, %15 : vector<20x37xf32>
    %30 = arith.mulf %27, %29 : vector<20x37xf32>
    %cst_9 = arith.constant dense<0.000000e+00> : vector<20xf32>
    %31 = vector.multi_reduction <add>, %30, %cst_9 [1] : vector<20x37xf32> to vector<20xf32>
    %32 = vector.shape_cast %31 : vector<20xf32> to vector<20x1xf32>
    %33 = vector.shape_cast %32 : vector<20x1xf32> to vector<1x20x1xf32>
    %cst_10 = arith.constant dense<0.000000e+00> : vector<1xf32>
    %34 = vector.multi_reduction <add>, %33, %cst_10 [1, 2] : vector<1x20x1xf32> to vector<1xf32>
    %35 = vector.shape_cast %34 : vector<1xf32> to vector<1x1x1xf32>
    %36 = vector.extract %35[0, 0, 0] : f32 from vector<1x1x1xf32>
    %37 = vector.broadcast %36 : f32 to vector<1x8x128xf32>
    %c0_11 = arith.constant 0 : index
    %c0_12 = arith.constant 0 : index
    %c0_13 = arith.constant 0 : index
    %38 = vector.load %arg3[%c0_11, %c0_12, %c0_13] : memref<1x8x128xf32, #tpu.memory_space<vmem>>, vector<1x8x128xf32>
    tpu.vector_store %arg3[%c0_11, %c0_12, %c0_13], %37 {strides = array<i32>} : memref<1x8x128xf32, #tpu.memory_space<vmem>>, vector<1x8x128xf32>,
    return
  }
  func.func @transform_0(%arg0: i32) -> (i32, i32) {
    %c0_i32 = arith.constant 0 : i32
    %c0_i32_0 = arith.constant 0 : i32
    return %arg0, %c0_i32 : i32, i32
  }
  func.func @transform_1(%arg0: i32) -> (i32, i32) {
    %c0_i32 = arith.constant 0 : i32
    %c0_i32_0 = arith.constant 0 : i32
    return %arg0, %c0_i32 : i32, i32
  }
  func.func @transform_2(%arg0: i32) -> (i32, i32, i32) {
    %c0_i32 = arith.constant 0 : i32
    %c0_i32_0 = arith.constant 0 : i32
    %c0_i32_1 = arith.constant 0 : i32
    return %arg0, %c0_i32, %c0_i32_0 : i32, i32, i32
  }
}

</mosaic_0001>

<llo_original>
// kernel: tpu_custom_call.1
$region0: #{tpu_custom_call.1}
  #allocation0 [shape = 'u32[]', space=smem, size = 0x4, offset = 0x4, fixed_abs, tag = 'smem constant byte address 0x4 - core index']
  #allocation1 [shape = 'u32[144,128]{1,0:T(1,128)}', space=vmem, size = 0x12000, scoped, tag = 'internal scratch']
  %s0 = inlined_call_operand.hbm [shape: f32[20,37], index: 0, kind: input, shape index: {}]
  %s1 = inlined_call_operand.hbm [shape: f32[20,37], index: 1, kind: input, shape index: {}]
  %s2 = inlined_call_operand.hbm [shape: f32[1,8,128], index: 2, kind: output, shape index: {}]
  %s3 = sld [smem:[#allocation0]]
  $region26: #{tpu_custom_call.1} parent=0
    _
  %s5 = ssub.s32 1, %s3
  %s6 = scalar_select 0, %s5, %s3
  $region1: #{tpu_custom_call.1} parent=0
    #allocation2 [shape = 'u8[12288]{0}', space=vmem, size = 0x3000, scoped, tag = 'input window, operand 0, single buffered']
    #allocation3 [shape = 's32[1]{0}', space=sflag, size = 0x4, scoped, tag = 'scoped memory for tpu_custom_call.1']
    #allocation4 [shape = 's32[1]{0}', space=sflag, size = 0x4, scoped, tag = 'scoped memory for tpu_custom_call.1']
    #allocation5 [shape = 'u8[12288]{0}', space=vmem, size = 0x3000, scoped, tag = 'input window, operand 1, single buffered']
    #allocation6 [shape = 's32[1]{0}', space=sflag, size = 0x4, scoped, tag = 'scoped memory for tpu_custom_call.1']
    #allocation7 [shape = 'u8[4096]{0}', space=vmem, size = 0x1000, scoped, tag = 'output window, operand 0, single buffered']
    %7 = vsyncpa [#allocation3], 0
    %8 = vsyncpa [#allocation6], 0
    %9 = vsyncpa [#allocation4], 0
    // Predicated region
    $region2: #{tpu_custom_call.1} parent=1 // pred_check
      _
    $region3: #{tpu_custom_call.1} parent=1 // pred_check_branch
      %11 = sbr.rel (0) target = $region5
    $region4: #{tpu_custom_call.1} parent=1 // pred_region
      %s13 = ssub.s32 384, 384
      %14 = vsyncadd [#allocation3], %s13
      %s15 = sshll.u32 [#allocation2], 4
      %s16 = int_to_ptr.vmem [resolvable:$true] %s15
      %21 = dma.hbm_to_vmem [thread:$0]  %s0, 384, %s16, [#allocation3], 128, 128, 8
    $region5: #{tpu_custom_call.1} parent=1 // pred_fallthru
      _
    // Predicated region
    $region6: #{tpu_custom_call.1} parent=1 // pred_check
      _
    $region7: #{tpu_custom_call.1} parent=1 // pred_check_branch
      %23 = sbr.rel (0) target = $region9
    $region8: #{tpu_custom_call.1} parent=1 // pred_region
      %s25 = ssub.s32 384, 384
      %26 = vsyncadd [#allocation6], %s25
      %s27 = sshll.u32 [#allocation5], 4
      %s28 = int_to_ptr.vmem [resolvable:$true] %s27
      %33 = dma.hbm_to_vmem [thread:$0]  %s1, 384, %s28, [#allocation6], 128, 128, 8
    $region9: #{tpu_custom_call.1} parent=1 // pred_fallthru
      _
    // Predicated region
    $region10: #{tpu_custom_call.1} parent=1 // pred_check
      _
    $region11: #{tpu_custom_call.1} parent=1 // pred_check_branch
      %35 = sbr.rel (0) target = $region13
    $region12: #{tpu_custom_call.1} parent=1 // pred_region
      %36 = dma.done [#allocation3], 384
    $region13: #{tpu_custom_call.1} parent=1 // pred_fallthru
      _
    // Predicated region
    $region14: #{tpu_custom_call.1} parent=1 // pred_check
      _
    $region15: #{tpu_custom_call.1} parent=1 // pred_check_branch
      %38 = sbr.rel (0) target = $region17
    $region16: #{tpu_custom_call.1} parent=1 // pred_region
      %39 = dma.done [#allocation6], 384
    $region17: #{tpu_custom_call.1} parent=1 // pred_fallthru
      _
    %v40 = vld [vmem:[#allocation2] sm:$0xff]
    %v41 = vld [vmem:[#allocation2 + $0x8] sm:$0xff]
    %v42 = vld [vmem:[#allocation2 + $0x10] sm:$0xf]
    %v43 = vmul.f32 %v40, 0.33333334
    %v44 = vmul.f32 %v41, 0.33333334
    %v45 = vmul.f32 %v42, 0.33333334
    %v46 = vld [vmem:[#allocation5] sm:$0xff]
    %v47 = vld [vmem:[#allocation5 + $0x8] sm:$0xff]
    %v48 = vld [vmem:[#allocation5 + $0x10] sm:$0xf]
    %v49 = vmul.f32 %v46, 0.33333334
    %v50 = vmul.f32 %v47, 0.33333334
    %v51 = vmul.f32 %v48, 0.33333334
    %vm52 = vcmask 302080
    %v53 = vsel %vm52, %v43, -inf
    %54 = vmax.xlane.f32.xlu0 %v53
    %v55 = vpop.xlane.xlu0 %54
    %v56 = vsel %vm52, %v44, -inf
    %57 = vmax.xlane.f32.xlu0 %v56
    %v58 = vpop.xlane.xlu0 %57
    %vm59 = vcmask 297984
    %v60 = vsel %vm59, %v45, -inf
    %61 = vmax.xlane.f32.xlu0 %v60
    %v62 = vpop.xlane.xlu0 %61
    %v63 = vsub.f32 %v43, %v55
    %v64 = vsub.f32 %v44, %v58
    %v65 = vsub.f32 %v45, %v62
    %v66 = vmul.f32 %v63, 1.442695
    %v67 = vpow.pop %v66
    %v68 = vmul.f32 %v64, 1.442695
    %v69 = vpow.pop %v68
    %v70 = vmul.f32 %v65, 1.442695
    %v71 = vpow.pop %v70
    %v72 = vsel %vm52, %v67, 0.0
    %73 = vadd.xlane.f32.xlu0 %v72
    %v74 = vpop.xlane.xlu0 %73
    %v75 = vsel %vm52, %v69, 0.0
    %76 = vadd.xlane.f32.xlu0 %v75
    %v77 = vpop.xlane.xlu0 %76
    %v78 = vsel %vm59, %v71, 0.0
    %79 = vadd.xlane.f32.xlu0 %v78
    %v80 = vpop.xlane.xlu0 %79
    %v81 = vlog2.pop %v74
    %v82 = vmul.f32 %v81, 0.6931472
    %v83 = vlog2.pop %v77
    %v84 = vmul.f32 %v83, 0.6931472
    %v85 = vlog2.pop %v80
    %v86 = vmul.f32 %v85, 0.6931472
    %v87 = vsub.f32 %v63, %v82
    %v88 = vsub.f32 %v64, %v84
    %v89 = vsub.f32 %v65, %v86
    %v90 = vsel %vm52, %v49, -inf
    %91 = vmax.xlane.f32.xlu0 %v90
    %v92 = vpop.xlane.xlu0 %91
    %v93 = vsel %vm52, %v50, -inf
    %94 = vmax.xlane.f32.xlu0 %v93
    %v95 = vpop.xlane.xlu0 %94
    %v96 = vsel %vm59, %v51, -inf
    %97 = vmax.xlane.f32.xlu0 %v96
    %v98 = vpop.xlane.xlu0 %97
    %v99 = vsub.f32 %v49, %v92
    %v100 = vsub.f32 %v50, %v95
    %v101 = vsub.f32 %v51, %v98
    %v102 = vmul.f32 %v99, 1.442695
    %v103 = vpow.pop %v102
    %v104 = vmul.f32 %v100, 1.442695
    %v105 = vpow.pop %v104
    %v106 = vmul.f32 %v101, 1.442695
    %v107 = vpow.pop %v106
    %v108 = vsel %vm52, %v103, 0.0
    %109 = vadd.xlane.f32.xlu0 %v108
    %v110 = vpop.xlane.xlu0 %109
    %v111 = vsel %vm52, %v105, 0.0
    %112 = vadd.xlane.f32.xlu0 %v111
    %v113 = vpop.xlane.xlu0 %112
    %v114 = vsel %vm59, %v107, 0.0
    %115 = vadd.xlane.f32.xlu0 %v114
    %v116 = vpop.xlane.xlu0 %115
    %v117 = vrcp.pop %v110
    %v118 = vrcp.pop %v113
    %v119 = vrcp.pop %v116
    %v120 = vmul.f32 %v103, %v117
    %v121 = vmul.f32 %v105, %v118
    %v122 = vmul.f32 %v107, %v119
    %v123 = vadd.f32 %v120, 1e-07
    %v124 = vadd.f32 %v121, 1e-07
    %v125 = vadd.f32 %v122, 1e-07
    %v126 = vlog2.pop %v123
    %v127 = vmul.f32 %v126, 0.6931472
    %v128 = vlog2.pop %v124
    %v129 = vmul.f32 %v128, 0.6931472
    %v130 = vlog2.pop %v125
    %v131 = vmul.f32 %v130, 0.6931472
    %v132 = vsub.f32 %v127, %v87
    %v133 = vsub.f32 %v129, %v88
    %v134 = vsub.f32 %v131, %v89
    %v135 = vmul.f32 %v123, %v132
    %v136 = vmul.f32 %v124, %v133
    %v137 = vmul.f32 %v125, %v134
    %v138 = vsel %vm52, %v135, 0.0
    %139 = vadd.xlane.f32.xlu0 %v138
    %v140 = vpop.xlane.xlu0 %139
    %v141 = vsel %vm52, %v136, 0.0
    %142 = vadd.xlane.f32.xlu0 %v141
    %v143 = vpop.xlane.xlu0 %142
    %v144 = vsel %vm59, %v137, 0.0
    %145 = vadd.xlane.f32.xlu0 %v144
    %v146 = vpop.xlane.xlu0 %145
    %vm147 = vcmask 7168
    %v148 = vsel %vm147, %v140, 0.0
    %v149 = vsel %vm147, %v143, 0.0
    %v150 = vadd.f32 %v148, %v149
    %vm151 = vcmask 3072
    %v152 = vsel %vm151, %v146, 0.0
    %v153 = vadd.f32 %v150, %v152
    %154 = vadd.xlane.f32.xlu0 %v153
    %v155 = vpop.xlane.xlu0 %154
    %v156 = vrot.slane %v155, 4
    %v157 = vadd.f32 %v155, %v156
    %v158 = vrot.slane %v157, 2
    %v159 = vadd.f32 %v157, %v158
    %v160 = vrot.slane %v159, 1
    %v161 = vadd.f32 %v159, %v160
    %s162 = vtos %v161
    %v163 = vstv %s162
    %164 = vst [vmem:[#allocation7] sm:$0xff] %v163
    // Predicated region
    $region18: #{tpu_custom_call.1} parent=1 // pred_check
      _
    $region19: #{tpu_custom_call.1} parent=1 // pred_check_branch
      %166 = sbr.rel (0) target = $region21
    $region20: #{tpu_custom_call.1} parent=1 // pred_region
      %s168 = ssub.s32 128, 128
      %169 = vsyncadd [#allocation4], %s168
      %s171 = sshll.u32 [#allocation7], 4
      %s172 = int_to_ptr.vmem [resolvable:$true] %s171
      %174 = dma.vmem_to_hbm [thread:$0]  %s172, 128, %s2, [#allocation4]
    $region21: #{tpu_custom_call.1} parent=1 // pred_fallthru
      _
    // Predicated region
    $region22: #{tpu_custom_call.1} parent=1 // pred_check
      _
    $region23: #{tpu_custom_call.1} parent=1 // pred_check_branch
      %176 = sbr.rel (0) target = $region25
    $region24: #{tpu_custom_call.1} parent=1 // pred_region
      %177 = dma.done [#allocation4], 128
    $region25: #{tpu_custom_call.1} parent=1 // pred_fallthru
      _
    %178 = vsyncpa [#allocation3], 1
    %179 = vsyncpa [#allocation6], 1
    %180 = vsyncpa [#allocation4], 1

</llo_original>
